<compile_context>
chip_gen: v6e
topology: v6e:2x2x1
jax: 0.10.0
libtpu: 0.0.40
codegen_flags: <defaults>
</compile_context>

<pallas_src>
import jax
import jax.numpy as jnp
from jax.experimental import pallas as pl
from jax.experimental.pallas import tpu as pltpu


TILE_N = 512   # max node-row tile per grid step
LANE = 128     # lane width: feature / hidden / class axes padded to this


def _round_up(n, m):
    return ((n + m - 1) // m) * m


def mlp_kernel(x_ref, w1_ref, b1_ref, w2_ref, b2_ref, w3_ref, b3_ref, out_ref):
    # x / weights are bf16; all dots accumulate in f32; epilogue stays f32.
    x = x_ref[...]

    # fc1 + relu  (padded feature cols of x / rows of W1 are zero -> no-op)
    h1 = jnp.dot(x, w1_ref[...], preferred_element_type=jnp.float32) + b1_ref[...]
    h1 = jnp.maximum(h1, 0.0)

    # fc2 + relu  (padded hidden lanes stay exactly 0 through relu)
    h2 = jnp.dot(h1.astype(jnp.bfloat16), w2_ref[...],
                 preferred_element_type=jnp.float32) + b2_ref[...]
    h2 = jnp.maximum(h2, 0.0)

    # fc3: padded class lanes get their mask for free via the -1e30 bias
    # (their matmul contribution is exactly 0), so no iota/where is needed.
    logits = jnp.dot(h2.astype(jnp.bfloat16), w3_ref[...],
                     preferred_element_type=jnp.float32) + b3_ref[...]

    # Numerically stable log_softmax over the class (lane) axis, f32 math.
    m = jnp.max(logits, axis=-1, keepdims=True)
    shifted = logits - m
    lse = jnp.log(jnp.sum(jnp.exp(shifted), axis=-1, keepdims=True))
    out_ref[...] = (shifted - lse).astype(out_ref.dtype)


def prepare_params(w1, b1, w2, b2, w3, b3):
    """One-time prep: pad weights/biases to 128 lanes and cast weights to bf16.

    w*: [in, out] (pre-transposed).  b*: [1, out].
    """
    f, h = w1.shape
    c = w3.shape[1]
    f_pad = _round_up(f, LANE)
    h_pad = _round_up(h, LANE)
    c_pad = _round_up(c, LANE)

    def pad_w(w, rows, cols):
        w = jnp.pad(w, ((0, rows - w.shape[0]), (0, cols - w.shape[1])))
        return w.astype(jnp.bfloat16)

    def pad_b(b, cols, fill=0.0):
        return jnp.pad(b, ((0, 0), (0, cols - b.shape[1])),
                       constant_values=fill).astype(jnp.float32)

    w1p = pad_w(w1, f_pad, h_pad)
    w2p = pad_w(w2, h_pad, h_pad)
    w3p = pad_w(w3, h_pad, c_pad)
    b1p = pad_b(b1, h_pad)
    b2p = pad_b(b2, h_pad)
    # Padded class lanes: huge negative bias == exact softmax mask, for free.
    b3p = pad_b(b3, c_pad, fill=-1e30)
    return (w1p, b1p, w2p, b2p, w3p, b3p)


def mlp_forward(x, params, num_classes):
    """x: [N, num_in] f32 (or bf16). params: output of prepare_params."""
    w1p, b1p, w2p, b2p, w3p, b3p = params
    n, f = x.shape
    f_pad = w1p.shape[0]
    c_pad = w3p.shape[1]

    xp = x.astype(jnp.bfloat16)
    if f_pad != f:
        # Pad feature lanes only (zero columns hit zero-padded W1 rows).
        xp = jnp.pad(xp, ((0, 0), (0, f_pad - f)))

    # Adaptive row tile: big tiles amortize per-step overhead; no row padding
    # of x — the partial last tile is handled by Pallas (row-confined garbage,
    # masked output stores).  Keep several grid steps when N is huge so v7x's
    # two TensorCores both get work.
    tile_n = min(TILE_N, _round_up(n, 8))
    grid = (pl.cdiv(n, tile_n),)

    row_spec = lambda cols: pl.BlockSpec((tile_n, cols), lambda i: (i, 0))
    resident = lambda shape: pl.BlockSpec(shape, lambda i: (0, 0))

    out_padded = pl.pallas_call(
        mlp_kernel,
        out_shape=jax.ShapeDtypeStruct((n, c_pad), jnp.bfloat16),
        grid=grid,
        in_specs=[
            row_spec(f_pad),
            resident(w1p.shape), resident(b1p.shape),
            resident(w2p.shape), resident(b2p.shape),
            resident(w3p.shape), resident(b3p.shape),
        ],
        out_specs=row_spec(c_pad),
        compiler_params=pltpu.CompilerParams(
            dimension_semantics=("parallel",)),
    )(xp, w1p, b1p, w2p, b2p, w3p, b3p)

    # Strip padded class lanes (row axis was never padded).
    return out_padded[:, :num_classes]


def init_linear(key, fan_in, fan_out):
    """Deterministic PyTorch-style (kaiming-uniform-ish) init; returns W^T, b."""
    kw, kb = jax.random.split(key)
    bound = 1.0 / jnp.sqrt(fan_in)
    w_t = jax.random.uniform(kw, (fan_in, fan_out), jnp.float32, -bound, bound)
    b = jax.random.uniform(kb, (1, fan_out), jnp.float32, -bound, bound)
    return w_t, b


def reference_forward(x, w1, b1, w2, b2, w3, b3):
    h1 = jax.nn.relu(x @ w1 + b1)
    h2 = jax.nn.relu(h1 @ w2 + b2)
    return jax.nn.log_softmax(h2 @ w3 + b3, axis=1)


if __name__ == "__main__":
    # Synthetic karate-club-like sizes (34 nodes, 34 features, 30 hidden, 4 classes).
    num_nodes = 34
    num_in = 34
    num_hidden = 30
    num_classes = 4

    key = jax.random.PRNGKey(0)
    kx, k1, k2, k3 = jax.random.split(key, 4)

    x = jax.random.normal(kx, (num_nodes, num_in), jnp.float32)
    w1, b1 = init_linear(k1, num_in, num_hidden)
    w2, b2 = init_linear(k2, num_hidden, num_hidden)
    w3, b3 = init_linear(k3, num_hidden, num_classes)

    params = prepare_params(w1, b1, w2, b2, w3, b3)

    forward = jax.jit(mlp_forward, static_argnums=(2,))
    out = forward(x, params, num_classes)
    out = jax.block_until_ready(out)

    ref = reference_forward(x, w1, b1, w2, b2, w3, b3)
    assert out.shape == (num_nodes, num_classes)
    # bf16 matmul operands + bf16 output -> loosened tolerance vs f32 reference.
    assert jnp.allclose(out.astype(jnp.float32), ref, atol=5e-2, rtol=5e-2), (
        float(jnp.max(jnp.abs(out.astype(jnp.float32) - ref))))

    print("KERNEL_OK")
</pallas_src>

<mosaic_0001>
module attributes {stable_mosaic.version = 11 : i64} {
  func.func @mlp_kernel(%arg0: i32, %arg1: memref<40x128xbf16, #tpu.memory_space<vmem>>, %arg2: memref<128x128xbf16, #tpu.memory_space<vmem>>, %arg3: memref<1x128xf32, #tpu.memory_space<vmem>>, %arg4: memref<128x128xbf16, #tpu.memory_space<vmem>>, %arg5: memref<1x128xf32, #tpu.memory_space<vmem>>, %arg6: memref<128x128xbf16, #tpu.memory_space<vmem>>, %arg7: memref<1x128xf32, #tpu.memory_space<vmem>>, %arg8: memref<40x128xbf16, #tpu.memory_space<vmem>>) attributes {dimension_semantics = [#tpu.dimension_semantics<parallel>], iteration_bounds = array<i64: 1>, scalar_prefetch = 0 : i64, scratch_operands = 0 : i64, tpu.core_type = #tpu.core_type<tc>, window_params = [{transform_indices = @transform_0, window_bounds = array<i64: 40, 128>}, {pipeline_mode = #tpu.pipeline_mode<synchronous>, transform_indices = @transform_1, window_bounds = array<i64: 128, 128>}, {pipeline_mode = #tpu.pipeline_mode<synchronous>, transform_indices = @transform_2, window_bounds = array<i64: 1, 128>}, {pipeline_mode = #tpu.pipeline_mode<synchronous>, transform_indices = @transform_3, window_bounds = array<i64: 128, 128>}, {pipeline_mode = #tpu.pipeline_mode<synchronous>, transform_indices = @transform_4, window_bounds = array<i64: 1, 128>}, {pipeline_mode = #tpu.pipeline_mode<synchronous>, transform_indices = @transform_5, window_bounds = array<i64: 128, 128>}, {pipeline_mode = #tpu.pipeline_mode<synchronous>, transform_indices = @transform_6, window_bounds = array<i64: 1, 128>}, {transform_indices = @transform_7, window_bounds = array<i64: 40, 128>}]} {
    %c0 = arith.constant 0 : index
    %c0_0 = arith.constant 0 : index
    %0 = vector.load %arg1[%c0, %c0_0] : memref<40x128xbf16, #tpu.memory_space<vmem>>, vector<40x128xbf16>
    %c0_1 = arith.constant 0 : index
    %c0_2 = arith.constant 0 : index
    %1 = vector.load %arg2[%c0_1, %c0_2] : memref<128x128xbf16, #tpu.memory_space<vmem>>, vector<128x128xbf16>
    %cst = arith.constant dense<0.000000e+00> : vector<40x128xf32>
    %2 = tpu.matmul %0, %1, %cst {dimension_numbers = #tpu.dot_dimension_numbers<[1], [0], [0], [1], [0, 0, 1, 1], [], []>} : vector<40x128xbf16>, vector<128x128xbf16>, vector<40x128xf32> -> vector<40x128xf32>
    %c0_3 = arith.constant 0 : index
    %c0_4 = arith.constant 0 : index
    %3 = vector.load %arg3[%c0_3, %c0_4] : memref<1x128xf32, #tpu.memory_space<vmem>>, vector<1x128xf32>
    %4 = vector.broadcast %3 : vector<1x128xf32> to vector<40x128xf32>
    %5 = arith.addf %2, %4 : vector<40x128xf32>
    %cst_5 = arith.constant 0.000000e+00 : f32
    %6 = vector.broadcast %cst_5 : f32 to vector<40x128xf32>
    %7 = arith.maximumf %5, %6 : vector<40x128xf32>
    %8 = arith.truncf %7 : vector<40x128xf32> to vector<40x128xbf16>
    %c0_6 = arith.constant 0 : index
    %c0_7 = arith.constant 0 : index
    %9 = vector.load %arg4[%c0_6, %c0_7] : memref<128x128xbf16, #tpu.memory_space<vmem>>, vector<128x128xbf16>
    %cst_8 = arith.constant dense<0.000000e+00> : vector<40x128xf32>
    %10 = tpu.matmul %8, %9, %cst_8 {dimension_numbers = #tpu.dot_dimension_numbers<[1], [0], [0], [1], [0, 0, 1, 1], [], []>} : vector<40x128xbf16>, vector<128x128xbf16>, vector<40x128xf32> -> vector<40x128xf32>
    %c0_9 = arith.constant 0 : index
    %c0_10 = arith.constant 0 : index
    %11 = vector.load %arg5[%c0_9, %c0_10] : memref<1x128xf32, #tpu.memory_space<vmem>>, vector<1x128xf32>
    %12 = vector.broadcast %11 : vector<1x128xf32> to vector<40x128xf32>
    %13 = arith.addf %10, %12 : vector<40x128xf32>
    %cst_11 = arith.constant 0.000000e+00 : f32
    %14 = vector.broadcast %cst_11 : f32 to vector<40x128xf32>
    %15 = arith.maximumf %13, %14 : vector<40x128xf32>
    %16 = arith.truncf %15 : vector<40x128xf32> to vector<40x128xbf16>
    %c0_12 = arith.constant 0 : index
    %c0_13 = arith.constant 0 : index
    %17 = vector.load %arg6[%c0_12, %c0_13] : memref<128x128xbf16, #tpu.memory_space<vmem>>, vector<128x128xbf16>
    %cst_14 = arith.constant dense<0.000000e+00> : vector<40x128xf32>
    %18 = tpu.matmul %16, %17, %cst_14 {dimension_numbers = #tpu.dot_dimension_numbers<[1], [0], [0], [1], [0, 0, 1, 1], [], []>} : vector<40x128xbf16>, vector<128x128xbf16>, vector<40x128xf32> -> vector<40x128xf32>
    %c0_15 = arith.constant 0 : index
    %c0_16 = arith.constant 0 : index
    %19 = vector.load %arg7[%c0_15, %c0_16] : memref<1x128xf32, #tpu.memory_space<vmem>>, vector<1x128xf32>
    %20 = vector.broadcast %19 : vector<1x128xf32> to vector<40x128xf32>
    %21 = arith.addf %18, %20 : vector<40x128xf32>
    %cst_17 = arith.constant dense<0xFF800000> : vector<40xf32>
    %22 = vector.multi_reduction <maximumf>, %21, %cst_17 [1] : vector<40x128xf32> to vector<40xf32>
    %23 = vector.shape_cast %22 : vector<40xf32> to vector<40x1xf32>
    %24 = vector.broadcast %23 : vector<40x1xf32> to vector<40x128xf32>
    %25 = arith.subf %21, %24 : vector<40x128xf32>
    %26 = math.exp %25 : vector<40x128xf32>
    %cst_18 = arith.constant dense<0.000000e+00> : vector<40xf32>
    %27 = vector.multi_reduction <add>, %26, %cst_18 [1] : vector<40x128xf32> to vector<40xf32>
    %28 = vector.shape_cast %27 : vector<40xf32> to vector<40x1xf32>
    %29 = math.log %28 : vector<40x1xf32>
    %30 = vector.broadcast %29 : vector<40x1xf32> to vector<40x128xf32>
    %31 = arith.subf %25, %30 : vector<40x128xf32>
    %32 = arith.truncf %31 : vector<40x128xf32> to vector<40x128xbf16>
    %c0_19 = arith.constant 0 : index
    %c0_20 = arith.constant 0 : index
    %33 = vector.load %arg8[%c0_19, %c0_20] : memref<40x128xbf16, #tpu.memory_space<vmem>>, vector<40x128xbf16>
    tpu.vector_store %arg8[%c0_19, %c0_20], %32 {strides = array<i32>} : memref<40x128xbf16, #tpu.memory_space<vmem>>, vector<40x128xbf16>,
    return
  }
  func.func @transform_0(%arg0: i32) -> (i32, i32) {
    %c0_i32 = arith.constant 0 : i32
    %c0_i32_0 = arith.constant 0 : i32
    return %arg0, %c0_i32 : i32, i32
  }
  func.func @transform_1(%arg0: i32) -> (i32, i32) {
    %c0_i32 = arith.constant 0 : i32
    %c0_i32_0 = arith.constant 0 : i32
    %c0_i32_1 = arith.constant 0 : i32
    return %c0_i32, %c0_i32_0 : i32, i32
  }
  func.func @transform_2(%arg0: i32) -> (i32, i32) {
    %c0_i32 = arith.constant 0 : i32
    %c0_i32_0 = arith.constant 0 : i32
    %c0_i32_1 = arith.constant 0 : i32
    return %c0_i32, %c0_i32_0 : i32, i32
  }
  func.func @transform_3(%arg0: i32) -> (i32, i32) {
    %c0_i32 = arith.constant 0 : i32
    %c0_i32_0 = arith.constant 0 : i32
    %c0_i32_1 = arith.constant 0 : i32
    return %c0_i32, %c0_i32_0 : i32, i32
  }
  func.func @transform_4(%arg0: i32) -> (i32, i32) {
    %c0_i32 = arith.constant 0 : i32
    %c0_i32_0 = arith.constant 0 : i32
    %c0_i32_1 = arith.constant 0 : i32
    return %c0_i32, %c0_i32_0 : i32, i32
  }
  func.func @transform_5(%arg0: i32) -> (i32, i32) {
    %c0_i32 = arith.constant 0 : i32
    %c0_i32_0 = arith.constant 0 : i32
    %c0_i32_1 = arith.constant 0 : i32
    return %c0_i32, %c0_i32_0 : i32, i32
  }
  func.func @transform_6(%arg0: i32) -> (i32, i32) {
    %c0_i32 = arith.constant 0 : i32
    %c0_i32_0 = arith.constant 0 : i32
    %c0_i32_1 = arith.constant 0 : i32
    return %c0_i32, %c0_i32_0 : i32, i32
  }
  func.func @transform_7(%arg0: i32) -> (i32, i32) {
    %c0_i32 = arith.constant 0 : i32
    %c0_i32_0 = arith.constant 0 : i32
    return %arg0, %c0_i32 : i32, i32
  }
}

</mosaic_0001>

<llo_original>
// kernel: mlp_forward.1
$region0: #{mlp_forward.1}
  #allocation0 [shape = 'u32[]', space=smem, size = 0x4, offset = 0x4, fixed_abs, tag = 'smem constant byte address 0x4 - core index']
  #allocation1 [shape = 'u32[144,128]{1,0:T(1,128)}', space=vmem, size = 0x12000, scoped, tag = 'internal scratch']
  %s0 = inlined_call_operand.vmem [shape: bf16[34,128], index: 0, kind: input, shape index: {}]
  %s1 = inlined_call_operand.vmem [shape: bf16[128,128], index: 1, kind: input, shape index: {}]
  %s2 = inlined_call_operand.vmem [shape: f32[1,128], index: 2, kind: input, shape index: {}]
  %s3 = inlined_call_operand.hbm [shape: bf16[128,128], index: 3, kind: input, shape index: {}]
  %s4 = inlined_call_operand.vmem [shape: f32[1,128], index: 4, kind: input, shape index: {}]
  %s5 = inlined_call_operand.hbm [shape: bf16[128,128], index: 5, kind: input, shape index: {}]
  %s6 = inlined_call_operand.vmem [shape: f32[1,128], index: 6, kind: input, shape index: {}]
  %s7 = inlined_call_operand.vmem [shape: bf16[34,128], index: 7, kind: output, shape index: {}]
  %s8 = sld [smem:[#allocation0]]
  $region46: #{mlp_forward.1} parent=0
    _
  %s10 = ssub.s32 1, %s8
  %s11 = scalar_select 0, %s10, %s8
  $region1: #{mlp_forward.1} parent=0
    #allocation2 [shape = 'u8[32768]{0}', space=vmem, size = 0x8000, scoped, tag = 'input window, operand 3, single buffered']
    #allocation3 [shape = 's32[1]{0}', space=sflag, size = 0x4, scoped, tag = 'scoped memory for mlp_forward.1']
    #allocation4 [shape = 'u8[32768]{0}', space=vmem, size = 0x8000, scoped, tag = 'input window, operand 5, single buffered']
    #allocation5 [shape = 's32[1]{0}', space=sflag, size = 0x4, scoped, tag = 'scoped memory for mlp_forward.1']
    %12 = vsyncpa [#allocation3], 0
    %13 = vsyncpa [#allocation5], 0
    // Predicated region
    $region2: #{mlp_forward.1} parent=1 // pred_check
      _
    $region3: #{mlp_forward.1} parent=1 // pred_check_branch
      %15 = sbr.rel (0) target = $region5
    $region4: #{mlp_forward.1} parent=1 // pred_region
      _
    $region5: #{mlp_forward.1} parent=1 // pred_fallthru
      _
    // Predicated region
    $region6: #{mlp_forward.1} parent=1 // pred_check
      _
    $region7: #{mlp_forward.1} parent=1 // pred_check_branch
      %17 = sbr.rel (0) target = $region9
    $region8: #{mlp_forward.1} parent=1 // pred_region
      _
    $region9: #{mlp_forward.1} parent=1 // pred_fallthru
      _
    // Predicated region
    $region10: #{mlp_forward.1} parent=1 // pred_check
      _
    $region11: #{mlp_forward.1} parent=1 // pred_check_branch
      %19 = sbr.rel (0) target = $region13
    $region12: #{mlp_forward.1} parent=1 // pred_region
      _
    $region13: #{mlp_forward.1} parent=1 // pred_fallthru
      _
    // Predicated region
    $region14: #{mlp_forward.1} parent=1 // pred_check
      _
    $region15: #{mlp_forward.1} parent=1 // pred_check_branch
      %21 = sbr.rel (0) target = $region17
    $region16: #{mlp_forward.1} parent=1 // pred_region
      %s23 = ssub.s32 1024, 1024
      %24 = vsyncadd [#allocation3], %s23
      %s25 = sshll.u32 [#allocation2], 4
      %s26 = int_to_ptr.vmem [resolvable:$true] %s25
      %31 = dma.hbm_to_vmem [thread:$0]  %s3, 1024, %s26, [#allocation3], 64, 64, 4
    $region17: #{mlp_forward.1} parent=1 // pred_fallthru
      _
    // Predicated region
    $region18: #{mlp_forward.1} parent=1 // pred_check
      _
    $region19: #{mlp_forward.1} parent=1 // pred_check_branch
      %33 = sbr.rel (0) target = $region21
    $region20: #{mlp_forward.1} parent=1 // pred_region
      _
    $region21: #{mlp_forward.1} parent=1 // pred_fallthru
      _
    // Predicated region
    $region22: #{mlp_forward.1} parent=1 // pred_check
      _
    $region23: #{mlp_forward.1} parent=1 // pred_check_branch
      %35 = sbr.rel (0) target = $region25
    $region24: #{mlp_forward.1} parent=1 // pred_region
      %s37 = ssub.s32 1024, 1024
      %38 = vsyncadd [#allocation5], %s37
      %s39 = sshll.u32 [#allocation4], 4
      %s40 = int_to_ptr.vmem [resolvable:$true] %s39
      %45 = dma.hbm_to_vmem [thread:$0]  %s5, 1024, %s40, [#allocation5], 64, 64, 4
    $region25: #{mlp_forward.1} parent=1 // pred_fallthru
      _
    // Predicated region
    $region26: #{mlp_forward.1} parent=1 // pred_check
      _
    $region27: #{mlp_forward.1} parent=1 // pred_check_branch
      %47 = sbr.rel (0) target = $region29
    $region28: #{mlp_forward.1} parent=1 // pred_region
      _
    $region29: #{mlp_forward.1} parent=1 // pred_fallthru
      _
    // Predicated region
    $region30: #{mlp_forward.1} parent=1 // pred_check
      _
    $region31: #{mlp_forward.1} parent=1 // pred_check_branch
      %49 = sbr.rel (0) target = $region33
    $region32: #{mlp_forward.1} parent=1 // pred_region
      %50 = dma.done [#allocation3], 1024
    $region33: #{mlp_forward.1} parent=1 // pred_fallthru
      _
    // Predicated region
    $region34: #{mlp_forward.1} parent=1 // pred_check
      _
    $region35: #{mlp_forward.1} parent=1 // pred_check_branch
      %52 = sbr.rel (0) target = $region37
    $region36: #{mlp_forward.1} parent=1 // pred_region
      %53 = dma.done [#allocation5], 1024
    $region37: #{mlp_forward.1} parent=1 // pred_fallthru
      _
    %v55 = vld [vmem:[%s0] sm:$0xf]
    %v56 = vld [vmem:[%s0 + $0x4] sm:$0xf]
    %v57 = vld [vmem:[%s0 + $0x8] sm:$0xf]
    %v58 = vld [vmem:[%s0 + $0xc] sm:$0xf]
    %v59 = vld [vmem:[%s0 + $0x10] sm:$0xf]
    %v60 = vld [vmem:[%s1] sm:$0xf]
    %v61 = vld [vmem:[%s1 + $0x4] sm:$0xf]
    %v62 = vld [vmem:[%s1 + $0x8] sm:$0xf]
    %v63 = vld [vmem:[%s1 + $0xc] sm:$0xf]
    %v64 = vld [vmem:[%s1 + $0x10] sm:$0xf]
    %v65 = vld [vmem:[%s1 + $0x14] sm:$0xf]
    %v66 = vld [vmem:[%s1 + $0x18] sm:$0xf]
    %v67 = vld [vmem:[%s1 + $0x1c] sm:$0xf]
    %v68 = vld [vmem:[%s1 + $0x20] sm:$0xf]
    %v69 = vld [vmem:[%s1 + $0x24] sm:$0xf]
    %v70 = vld [vmem:[%s1 + $0x28] sm:$0xf]
    %v71 = vld [vmem:[%s1 + $0x2c] sm:$0xf]
    %v72 = vld [vmem:[%s1 + $0x30] sm:$0xf]
    %v73 = vld [vmem:[%s1 + $0x34] sm:$0xf]
    %v74 = vld [vmem:[%s1 + $0x38] sm:$0xf]
    %v75 = vld [vmem:[%s1 + $0x3c] sm:$0xf]
    %v76 = vld [vmem:[%s2] sm:$0x1]
    %v78 = vlaneseq
    %v79 = vshrl.u32 %v78, 7
    %v80 = vsub.s32 0, %v79
    %v81 = vrot.slane %v76, %v80
    %v88 = vunpack.c.l.b16 %v55
    %v89 = vunpack.c.l.b16 %v56
    %v90 = vunpack.c.l.b16 %v57
    %v91 = vunpack.c.l.b16 %v58
    %v92 = vunpack.c.l.b16 %v59
    %v93 = vpack.c.b16 %v89, %v88
    %v94 = vpack.c.b16 %v91, %v90
    %v95 = vpack.c.b16 %v92, %v92
    %v115 = vunpack.c.l.b16 %v60
    %v116 = vunpack.c.l.b16 %v61
    %v117 = vunpack.c.l.b16 %v62
    %v118 = vunpack.c.l.b16 %v63
    %v119 = vunpack.c.l.b16 %v64
    %v120 = vunpack.c.l.b16 %v65
    %v121 = vunpack.c.l.b16 %v66
    %v122 = vunpack.c.l.b16 %v67
    %v123 = vunpack.c.l.b16 %v68
    %v124 = vunpack.c.l.b16 %v69
    %v125 = vunpack.c.l.b16 %v70
    %v126 = vunpack.c.l.b16 %v71
    %v127 = vunpack.c.l.b16 %v72
    %v128 = vunpack.c.l.b16 %v73
    %v129 = vunpack.c.l.b16 %v74
    %v130 = vunpack.c.l.b16 %v75
    %v131 = vpack.c.b16 %v116, %v115
    %v132 = vpack.c.b16 %v118, %v117
    %v133 = vpack.c.b16 %v120, %v119
    %v134 = vpack.c.b16 %v122, %v121
    %v135 = vpack.c.b16 %v124, %v123
    %v136 = vpack.c.b16 %v126, %v125
    %v137 = vpack.c.b16 %v128, %v127
    %v138 = vpack.c.b16 %v130, %v129
    %147 = vmatprep.subr.bf16.mxu0 0
    %148 = vmatpush1.bf16.msra.mxu0 %v138
    %149 = vmatprep.subr.bf16.mxu0 0
    %150 = vmatpush1.bf16.msra.mxu0 %v137
    %151 = vmatprep.subr.bf16.mxu0 0
    %152 = vmatpush1.bf16.msra.mxu0 %v136
    %153 = vmatprep.subr.bf16.mxu0 0
    %154 = vmatpush1.bf16.msra.mxu0 %v135
    %155 = vmatprep.subr.bf16.mxu0 0
    %156 = vmatpush1.bf16.msra.mxu0 %v134
    %157 = vmatprep.subr.bf16.mxu0 0
    %158 = vmatpush1.bf16.msra.mxu0 %v133
    %159 = vmatprep.subr.bf16.mxu0 0
    %160 = vmatpush1.bf16.msra.mxu0 %v132
    %161 = vmatprep.subr.bf16.mxu0 0
    %162 = vmatpush1.bf16.msra.mxu0 %v131
    %163 = vmatprep.subr.bf16.mxu0 0
    %164 = vmatpush2.bf16.msra.mxu0 0
    %165 = vmatprep.subr.bf16.mxu0 0
    %166 = vmatpush2.bf16.msra.mxu0 0
    %167 = vmatprep.subr.bf16.mxu0 0
    %168 = vmatpush2.bf16.msra.mxu0 0
    %169 = vmatprep.subr.bf16.mxu0 0
    %170 = vmatpush2.bf16.msra.mxu0 0
    %171 = vmatprep.subr.bf16.mxu0 0
    %172 = vmatpush2.bf16.msra.mxu0 0
    %173 = vmatprep.subr.bf16.mxu0 0
    %174 = vmatpush2.bf16.msra.mxu0 0
    %175 = vmatprep.subr.bf16.mxu0 0
    %176 = vmatpush2.bf16.msra.mxu0 0
    %177 = vmatprep.subr.bf16.mxu0 0
    %178 = vmatpush2.bf16.msra.mxu0 0
    %179 = vmatprep.mubr.bf16.mxu0 0
    %180 = vmatmul.mubr.bf16.gmra.mxu0 %v93
    %v181 = vpop.f32.mrf.mxu0
    %v182 = vadd.f32 %v81, %v181
    %v183 = vpop.f32.mrf.mxu0
    %v184 = vpop.f32.mrf.mxu0
    %v185 = vadd.f32 %v81, %v184
    %v186 = vpop.f32.mrf.mxu0
    %187 = vmatprep.mubr.bf16.mxu0 0
    %188 = vmatmul.mubr.bf16.gmra.mxu0 %v94
    %v189 = vpop.f32.mrf.mxu0
    %v190 = vadd.f32 %v81, %v189
    %v191 = vpop.f32.mrf.mxu0
    %v192 = vpop.f32.mrf.mxu0
    %v193 = vadd.f32 %v81, %v192
    %v194 = vpop.f32.mrf.mxu0
    %195 = vmatprep.mubr.bf16.mxu0 0
    %196 = vmatmul.mubr.bf16.gmra.mxu0 %v95
    %v197 = vpop.f32.mrf.mxu0
    %v198 = vadd.f32 %v81, %v197
    %v199 = vpop.f32.mrf.mxu0
    %v200 = vpop.f32.mrf.mxu0
    %v201 = vpop.f32.mrf.mxu0
    %202 = vdwg.mxu0
    %v203 = vmax.f32 %v182, 0.0
    %v204 = vmax.f32 %v185, 0.0
    %v205 = vmax.f32 %v190, 0.0
    %v206 = vmax.f32 %v193, 0.0
    %v207 = vmax.f32 %v198, 0.0
    %v208 = vpack.c.bf16 %v204, %v203
    %v209 = vpack.c.bf16 %v206, %v205
    %v210 = vpack.c.bf16 %v207, %v207
    %v211 = vld [vmem:[#allocation2] sm:$0xf]
    %v212 = vld [vmem:[#allocation2 + $0x4] sm:$0xf]
    %v213 = vld [vmem:[#allocation2 + $0x8] sm:$0xf]
    %v214 = vld [vmem:[#allocation2 + $0xc] sm:$0xf]
    %v215 = vld [vmem:[#allocation2 + $0x10] sm:$0xf]
    %v216 = vld [vmem:[#allocation2 + $0x14] sm:$0xf]
    %v217 = vld [vmem:[#allocation2 + $0x18] sm:$0xf]
    %v218 = vld [vmem:[#allocation2 + $0x1c] sm:$0xf]
    %v219 = vld [vmem:[#allocation2 + $0x20] sm:$0xf]
    %v220 = vld [vmem:[#allocation2 + $0x24] sm:$0xf]
    %v221 = vld [vmem:[#allocation2 + $0x28] sm:$0xf]
    %v222 = vld [vmem:[#allocation2 + $0x2c] sm:$0xf]
    %v223 = vld [vmem:[#allocation2 + $0x30] sm:$0xf]
    %v224 = vld [vmem:[#allocation2 + $0x34] sm:$0xf]
    %v225 = vld [vmem:[#allocation2 + $0x38] sm:$0xf]
    %v226 = vld [vmem:[#allocation2 + $0x3c] sm:$0xf]
    %v227 = vld [vmem:[%s4] sm:$0x1]
    %v229 = vlaneseq
    %v230 = vshrl.u32 %v229, 7
    %v231 = vsub.s32 0, %v230
    %v232 = vrot.slane %v227, %v231
    %v250 = vunpack.c.l.b16 %v211
    %v251 = vunpack.c.l.b16 %v212
    %v252 = vunpack.c.l.b16 %v213
    %v253 = vunpack.c.l.b16 %v214
    %v254 = vunpack.c.l.b16 %v215
    %v255 = vunpack.c.l.b16 %v216
    %v256 = vunpack.c.l.b16 %v217
    %v257 = vunpack.c.l.b16 %v218
    %v258 = vunpack.c.l.b16 %v219
    %v259 = vunpack.c.l.b16 %v220
    %v260 = vunpack.c.l.b16 %v221
    %v261 = vunpack.c.l.b16 %v222
    %v262 = vunpack.c.l.b16 %v223
    %v263 = vunpack.c.l.b16 %v224
    %v264 = vunpack.c.l.b16 %v225
    %v265 = vunpack.c.l.b16 %v226
    %v266 = vpack.c.b16 %v251, %v250
    %v267 = vpack.c.b16 %v253, %v252
    %v268 = vpack.c.b16 %v255, %v254
    %v269 = vpack.c.b16 %v257, %v256
    %v270 = vpack.c.b16 %v259, %v258
    %v271 = vpack.c.b16 %v261, %v260
    %v272 = vpack.c.b16 %v263, %v262
    %v273 = vpack.c.b16 %v265, %v264
    %282 = vmatprep.subr.bf16.mxu0 0
    %283 = vmatpush1.bf16.msra.mxu0 %v273
    %284 = vmatprep.subr.bf16.mxu0 0
    %285 = vmatpush1.bf16.msra.mxu0 %v272
    %286 = vmatprep.subr.bf16.mxu0 0
    %287 = vmatpush1.bf16.msra.mxu0 %v271
    %288 = vmatprep.subr.bf16.mxu0 0
    %289 = vmatpush1.bf16.msra.mxu0 %v270
    %290 = vmatprep.subr.bf16.mxu0 0
    %291 = vmatpush1.bf16.msra.mxu0 %v269
    %292 = vmatprep.subr.bf16.mxu0 0
    %293 = vmatpush1.bf16.msra.mxu0 %v268
    %294 = vmatprep.subr.bf16.mxu0 0
    %295 = vmatpush1.bf16.msra.mxu0 %v267
    %296 = vmatprep.subr.bf16.mxu0 0
    %297 = vmatpush1.bf16.msra.mxu0 %v266
    %298 = vmatprep.subr.bf16.mxu0 0
    %299 = vmatpush2.bf16.msra.mxu0 0
    %300 = vmatprep.subr.bf16.mxu0 0
    %301 = vmatpush2.bf16.msra.mxu0 0
    %302 = vmatprep.subr.bf16.mxu0 0
    %303 = vmatpush2.bf16.msra.mxu0 0
    %304 = vmatprep.subr.bf16.mxu0 0
    %305 = vmatpush2.bf16.msra.mxu0 0
    %306 = vmatprep.subr.bf16.mxu0 0
    %307 = vmatpush2.bf16.msra.mxu0 0
    %308 = vmatprep.subr.bf16.mxu0 0
    %309 = vmatpush2.bf16.msra.mxu0 0
    %310 = vmatprep.subr.bf16.mxu0 0
    %311 = vmatpush2.bf16.msra.mxu0 0
    %312 = vmatprep.subr.bf16.mxu0 0
    %313 = vmatpush2.bf16.msra.mxu0 0
    %314 = vmatprep.mubr.bf16.mxu0 0
    %315 = vmatmul.mubr.bf16.gmra.mxu0 %v208
    %v316 = vpop.f32.mrf.mxu0
    %v317 = vadd.f32 %v232, %v316
    %v318 = vpop.f32.mrf.mxu0
    %v319 = vpop.f32.mrf.mxu0
    %v320 = vadd.f32 %v232, %v319
    %v321 = vpop.f32.mrf.mxu0
    %322 = vmatprep.mubr.bf16.mxu0 0
    %323 = vmatmul.mubr.bf16.gmra.mxu0 %v209
    %v324 = vpop.f32.mrf.mxu0
    %v325 = vadd.f32 %v232, %v324
    %v326 = vpop.f32.mrf.mxu0
    %v327 = vpop.f32.mrf.mxu0
    %v328 = vadd.f32 %v232, %v327
    %v329 = vpop.f32.mrf.mxu0
    %330 = vmatprep.mubr.bf16.mxu0 0
    %331 = vmatmul.mubr.bf16.gmra.mxu0 %v210
    %v332 = vpop.f32.mrf.mxu0
    %v333 = vadd.f32 %v232, %v332
    %v334 = vpop.f32.mrf.mxu0
    %v335 = vpop.f32.mrf.mxu0
    %v336 = vpop.f32.mrf.mxu0
    %337 = vdwg.mxu0
    %v338 = vmax.f32 %v317, 0.0
    %v339 = vmax.f32 %v320, 0.0
    %v340 = vmax.f32 %v325, 0.0
    %v341 = vmax.f32 %v328, 0.0
    %v342 = vmax.f32 %v333, 0.0
    %v343 = vpack.c.bf16 %v339, %v338
    %v344 = vpack.c.bf16 %v341, %v340
    %v345 = vpack.c.bf16 %v342, %v342
    %v346 = vld [vmem:[#allocation4] sm:$0xf]
    %v347 = vld [vmem:[#allocation4 + $0x4] sm:$0xf]
    %v348 = vld [vmem:[#allocation4 + $0x8] sm:$0xf]
    %v349 = vld [vmem:[#allocation4 + $0xc] sm:$0xf]
    %v350 = vld [vmem:[#allocation4 + $0x10] sm:$0xf]
    %v351 = vld [vmem:[#allocation4 + $0x14] sm:$0xf]
    %v352 = vld [vmem:[#allocation4 + $0x18] sm:$0xf]
    %v353 = vld [vmem:[#allocation4 + $0x1c] sm:$0xf]
    %v354 = vld [vmem:[#allocation4 + $0x20] sm:$0xf]
    %v355 = vld [vmem:[#allocation4 + $0x24] sm:$0xf]
    %v356 = vld [vmem:[#allocation4 + $0x28] sm:$0xf]
    %v357 = vld [vmem:[#allocation4 + $0x2c] sm:$0xf]
    %v358 = vld [vmem:[#allocation4 + $0x30] sm:$0xf]
    %v359 = vld [vmem:[#allocation4 + $0x34] sm:$0xf]
    %v360 = vld [vmem:[#allocation4 + $0x38] sm:$0xf]
    %v361 = vld [vmem:[#allocation4 + $0x3c] sm:$0xf]
    %v362 = vld [vmem:[%s6] sm:$0x1]
    %v364 = vlaneseq
    %v365 = vshrl.u32 %v364, 7
    %v366 = vsub.s32 0, %v365
    %v367 = vrot.slane %v362, %v366
    %v385 = vunpack.c.l.b16 %v346
    %v386 = vunpack.c.l.b16 %v347
    %v387 = vunpack.c.l.b16 %v348
    %v388 = vunpack.c.l.b16 %v349
    %v389 = vunpack.c.l.b16 %v350
    %v390 = vunpack.c.l.b16 %v351
    %v391 = vunpack.c.l.b16 %v352
    %v392 = vunpack.c.l.b16 %v353
    %v393 = vunpack.c.l.b16 %v354
    %v394 = vunpack.c.l.b16 %v355
    %v395 = vunpack.c.l.b16 %v356
    %v396 = vunpack.c.l.b16 %v357
    %v397 = vunpack.c.l.b16 %v358
    %v398 = vunpack.c.l.b16 %v359
    %v399 = vunpack.c.l.b16 %v360
    %v400 = vunpack.c.l.b16 %v361
    %v401 = vpack.c.b16 %v386, %v385
    %v402 = vpack.c.b16 %v388, %v387
    %v403 = vpack.c.b16 %v390, %v389
    %v404 = vpack.c.b16 %v392, %v391
    %v405 = vpack.c.b16 %v394, %v393
    %v406 = vpack.c.b16 %v396, %v395
    %v407 = vpack.c.b16 %v398, %v397
    %v408 = vpack.c.b16 %v400, %v399
    %417 = vmatprep.subr.bf16.mxu0 0
    %418 = vmatpush1.bf16.msra.mxu0 %v408
    %419 = vmatprep.subr.bf16.mxu0 0
    %420 = vmatpush1.bf16.msra.mxu0 %v407
    %421 = vmatprep.subr.bf16.mxu0 0
    %422 = vmatpush1.bf16.msra.mxu0 %v406
    %423 = vmatprep.subr.bf16.mxu0 0
    %424 = vmatpush1.bf16.msra.mxu0 %v405
    %425 = vmatprep.subr.bf16.mxu0 0
    %426 = vmatpush1.bf16.msra.mxu0 %v404
    %427 = vmatprep.subr.bf16.mxu0 0
    %428 = vmatpush1.bf16.msra.mxu0 %v403
    %429 = vmatprep.subr.bf16.mxu0 0
    %430 = vmatpush1.bf16.msra.mxu0 %v402
    %431 = vmatprep.subr.bf16.mxu0 0
    %432 = vmatpush1.bf16.msra.mxu0 %v401
    %433 = vmatprep.subr.bf16.mxu0 0
    %434 = vmatpush2.bf16.msra.mxu0 0
    %435 = vmatprep.subr.bf16.mxu0 0
    %436 = vmatpush2.bf16.msra.mxu0 0
    %437 = vmatprep.subr.bf16.mxu0 0
    %438 = vmatpush2.bf16.msra.mxu0 0
    %439 = vmatprep.subr.bf16.mxu0 0
    %440 = vmatpush2.bf16.msra.mxu0 0
    %441 = vmatprep.subr.bf16.mxu0 0
    %442 = vmatpush2.bf16.msra.mxu0 0
    %443 = vmatprep.subr.bf16.mxu0 0
    %444 = vmatpush2.bf16.msra.mxu0 0
    %445 = vmatprep.subr.bf16.mxu0 0
    %446 = vmatpush2.bf16.msra.mxu0 0
    %447 = vmatprep.subr.bf16.mxu0 0
    %448 = vmatpush2.bf16.msra.mxu0 0
    %449 = vmatprep.mubr.bf16.mxu0 0
    %450 = vmatmul.mubr.bf16.gmra.mxu0 %v343
    %v451 = vpop.f32.mrf.mxu0
    %v452 = vadd.f32 %v367, %v451
    %v453 = vpop.f32.mrf.mxu0
    %v454 = vpop.f32.mrf.mxu0
    %v455 = vadd.f32 %v367, %v454
    %v456 = vpop.f32.mrf.mxu0
    %457 = vmatprep.mubr.bf16.mxu0 0
    %458 = vmatmul.mubr.bf16.gmra.mxu0 %v344
    %v459 = vpop.f32.mrf.mxu0
    %v460 = vadd.f32 %v367, %v459
    %v461 = vpop.f32.mrf.mxu0
    %v462 = vpop.f32.mrf.mxu0
    %v463 = vadd.f32 %v367, %v462
    %v464 = vpop.f32.mrf.mxu0
    %465 = vmatprep.mubr.bf16.mxu0 0
    %466 = vmatmul.mubr.bf16.gmra.mxu0 %v345
    %v467 = vpop.f32.mrf.mxu0
    %v468 = vadd.f32 %v367, %v467
    %v469 = vpop.f32.mrf.mxu0
    %v470 = vpop.f32.mrf.mxu0
    %v471 = vpop.f32.mrf.mxu0
    %472 = vdwg.mxu0
    %473 = vmax.xlane.f32.xlu0 %v452
    %v474 = vpop.xlane.xlu0 %473
    %475 = vmax.xlane.f32.xlu0 %v455
    %v476 = vpop.xlane.xlu0 %475
    %477 = vmax.xlane.f32.xlu0 %v460
    %v478 = vpop.xlane.xlu0 %477
    %479 = vmax.xlane.f32.xlu0 %v463
    %v480 = vpop.xlane.xlu0 %479
    %481 = vmax.xlane.f32.xlu0 %v468
    %v482 = vpop.xlane.xlu0 %481
    %v483 = vsub.f32 %v452, %v474
    %v484 = vsub.f32 %v455, %v476
    %v485 = vsub.f32 %v460, %v478
    %v486 = vsub.f32 %v463, %v480
    %v487 = vsub.f32 %v468, %v482
    %v488 = vmul.f32 %v483, 1.442695
    %v489 = vpow.pop %v488
    %v490 = vmul.f32 %v484, 1.442695
    %v491 = vpow.pop %v490
    %v492 = vmul.f32 %v485, 1.442695
    %v493 = vpow.pop %v492
    %v494 = vmul.f32 %v486, 1.442695
    %v495 = vpow.pop %v494
    %v496 = vmul.f32 %v487, 1.442695
    %v497 = vpow.pop %v496
    %498 = vadd.xlane.f32.xlu0 %v489
    %v499 = vpop.xlane.xlu0 %498
    %500 = vadd.xlane.f32.xlu0 %v491
    %v501 = vpop.xlane.xlu0 %500
    %502 = vadd.xlane.f32.xlu0 %v493
    %v503 = vpop.xlane.xlu0 %502
    %504 = vadd.xlane.f32.xlu0 %v495
    %v505 = vpop.xlane.xlu0 %504
    %506 = vadd.xlane.f32.xlu0 %v497
    %v507 = vpop.xlane.xlu0 %506
    %v508 = vlog2.pop %v499
    %v509 = vmul.f32 %v508, 0.6931472
    %v510 = vlog2.pop %v501
    %v511 = vmul.f32 %v510, 0.6931472
    %v512 = vlog2.pop %v503
    %v513 = vmul.f32 %v512, 0.6931472
    %v514 = vlog2.pop %v505
    %v515 = vmul.f32 %v514, 0.6931472
    %v516 = vlog2.pop %v507
    %v517 = vmul.f32 %v516, 0.6931472
    %v518 = vsub.f32 %v483, %v509
    %v519 = vsub.f32 %v484, %v511
    %v520 = vsub.f32 %v485, %v513
    %v521 = vsub.f32 %v486, %v515
    %v522 = vsub.f32 %v487, %v517
    %v523 = vpack.c.bf16 %v519, %v518
    %v524 = vpack.c.bf16 %v521, %v520
    %v525 = vpack.c.bf16 %v522, %v522
    %v529 = vunpack.c.l.b16 %v523
    %v530 = vunpack.c.h.b16 %v523
    %v531 = vunpack.c.l.b16 %v524
    %v532 = vunpack.c.h.b16 %v524
    %v533 = vunpack.c.l.b16 %v525
    %v534 = vpack.c.b16 %v529, %v529
    %v535 = vpack.c.b16 %v530, %v530
    %v536 = vpack.c.b16 %v531, %v531
    %v537 = vpack.c.b16 %v532, %v532
    %v538 = vpack.c.b16 %v533, %v533
    %544 = vst [vmem:[%s7] sm:$0xf] %v534
    %545 = vst [vmem:[%s7 + $0x4] sm:$0xf] %v535
    %546 = vst [vmem:[%s7 + $0x8] sm:$0xf] %v536
    %547 = vst [vmem:[%s7 + $0xc] sm:$0xf] %v537
    %548 = vst [vmem:[%s7 + $0x10] sm:$0xf] %v538
    // Predicated region
    $region38: #{mlp_forward.1} parent=1 // pred_check
      _
    $region39: #{mlp_forward.1} parent=1 // pred_check_branch
      %550 = sbr.rel (0) target = $region41
    $region40: #{mlp_forward.1} parent=1 // pred_region
      _
    $region41: #{mlp_forward.1} parent=1 // pred_fallthru
      _
    // Predicated region
    $region42: #{mlp_forward.1} parent=1 // pred_check
      _
    $region43: #{mlp_forward.1} parent=1 // pred_check_branch
      %552 = sbr.rel (0) target = $region45
    $region44: #{mlp_forward.1} parent=1 // pred_region
      _
    $region45: #{mlp_forward.1} parent=1 // pred_fallthru
      _
    %553 = vsyncpa [#allocation3], 1
    %554 = vsyncpa [#allocation5], 1

</llo_original>
